<compile_context>
chip_gen: v6e
topology: v6e:2x2x1
jax: 0.10.0
libtpu: 0.0.40
codegen_flags: <defaults>
</compile_context>

<pallas_src>
import math
import functools

import jax
import jax.numpy as jnp
from jax.experimental import pallas as pl
from jax.experimental.pallas import tpu as pltpu

# module "hyper-parameters" (the torch forward references these as globals)
DROPOUT_P = 0.1
HEAD_DIM = 64
INV_SCALE_FACTOR = math.sqrt(HEAD_DIM)


def _attn_kernel(seed_ref, q_ref, k_ref, v_ref, o_ref, *, dropout_p, scale):
    """One (TQ, D) query tile against the full (S, D) k/v slab of one head.

    seed_ref : SMEM scalar-prefetch, shape (1,) int32
    q_ref    : VMEM (TQ, D) f32
    k_ref/v_ref : VMEM (S, D) f32
    o_ref    : VMEM (TQ, D) f32
    """
    b = pl.program_id(0)        # head index
    qi = pl.program_id(1)       # query-tile index
    n_q = pl.num_programs(1)

    # Fold the 1/inv_scale factor into q (TQ*D elements, not TQ*S), then feed
    # the MXU bf16 operands with f32 accumulation.
    q = (q_ref[...] * jnp.float32(scale)).astype(jnp.bfloat16)
    k = k_ref[...].astype(jnp.bfloat16)

    # s = q @ k^T, contraction on the last dim of both operands (no k.T relayout)
    s = jax.lax.dot_general(
        q, k,
        dimension_numbers=(((1,), (1,)), ((), ())),
        preferred_element_type=jnp.float32,
    )  # (TQ, S) f32

    # softmax over the key dimension
    m = jnp.max(s, axis=-1, keepdims=True)
    e = jnp.exp(s - m)
    l = jnp.sum(e, axis=-1, keepdims=True)
    p = e / l

    # dropout: counter-based hash PRNG (pure vector integer ops -> lowers on
    # TPU and in interpret mode), keep/drop decided in the integer domain.
    if dropout_p > 0.0:
        TQ, S = p.shape
        rows = jax.lax.broadcasted_iota(jnp.int32, (TQ, S), 0)
        cols = jax.lax.broadcasted_iota(jnp.int32, (TQ, S), 1)
        # unique element id over the whole (BH, S, S) probability tensor
        # (per head and per query tile), plus a seed offset; wraps mod 2^32.
        gid = (((b * n_q + qi) * TQ + rows) * S + cols
               + seed_ref[0] * jnp.int32(1000003))
        x = gid.astype(jnp.uint32)
        # lowbias32 avalanche hash
        x = (x ^ (x >> 16)) * jnp.uint32(0x7FEB352D)
        x = (x ^ (x >> 15)) * jnp.uint32(0x846CA68B)
        x = x ^ (x >> 16)
        r24 = (x >> 8).astype(jnp.int32)                      # uniform in [0, 2^24)
        thresh = jnp.int32(int(round(dropout_p * (1 << 24))))  # drop iff r24 < thresh
        keep = r24 >= thresh
        p = jnp.where(keep, p * jnp.float32(1.0 / (1.0 - dropout_p)),
                      jnp.float32(0.0))

    # v5 = dropout(softmax) @ value
    o_ref[...] = jnp.dot(
        p.astype(jnp.bfloat16), v_ref[...].astype(jnp.bfloat16),
        preferred_element_type=jnp.float32,
    ).astype(o_ref.dtype)


def sdpa_dropout(q, k, v, seed, *, dropout_p=DROPOUT_P,
                 inv_scale=INV_SCALE_FACTOR, q_tile=None):
    """q, k, v: [BH, S, D] float32. Returns [BH, S, D] float32."""
    BH, S, D = q.shape
    assert k.shape == (BH, S, D) and v.shape == (BH, S, D)

    if q_tile is None:
        q_tile = min(S, 256)
    assert S % q_tile == 0 and q_tile % 8 == 0
    n_q = S // q_tile

    kernel = functools.partial(
        _attn_kernel, dropout_p=float(dropout_p), scale=1.0 / float(inv_scale))

    grid_spec = pltpu.PrefetchScalarGridSpec(
        num_scalar_prefetch=1,
        grid=(BH, n_q),
        in_specs=[
            pl.BlockSpec((None, q_tile, D), lambda b, i, seed_ref: (b, i, 0)),
            pl.BlockSpec((None, S, D), lambda b, i, seed_ref: (b, 0, 0)),
            pl.BlockSpec((None, S, D), lambda b, i, seed_ref: (b, 0, 0)),
        ],
        out_specs=pl.BlockSpec((None, q_tile, D), lambda b, i, seed_ref: (b, i, 0)),
    )

    cost = pl.CostEstimate(
        flops=4 * BH * S * S * D,          # two matmuls
        transcendentals=BH * S * S,        # exp
        bytes_accessed=4 * BH * S * D * 4, # q, k, v, o in f32
    )

    return pl.pallas_call(
        kernel,
        out_shape=jax.ShapeDtypeStruct((BH, S, D), jnp.float32),
        grid_spec=grid_spec,
        compiler_params=pltpu.CompilerParams(
            dimension_semantics=("parallel", "parallel"),
        ),
        cost_estimate=cost,
    )(jnp.asarray([seed], dtype=jnp.int32), q, k, v)


if __name__ == "__main__":
    key = jax.random.PRNGKey(0)
    kq, kk, kv = jax.random.split(key, 3)

    B, H, S, D = 2, 2, 128, HEAD_DIM
    BH = B * H
    TQ = 64  # 8 grid steps total: (BH=4) x (S/TQ=2)

    q = jax.random.normal(kq, (BH, S, D), dtype=jnp.float32)
    k = jax.random.normal(kk, (BH, S, D), dtype=jnp.float32)
    v = jax.random.normal(kv, (BH, S, D), dtype=jnp.float32)

    # sanity check against a pure-JAX reference with dropout disabled
    out_nodrop = sdpa_dropout(q, k, v, seed=0, dropout_p=0.0, q_tile=TQ)
    logits = jnp.einsum("bqd,bkd->bqk", q, k) / INV_SCALE_FACTOR
    ref = jnp.einsum("bqk,bkd->bqd", jax.nn.softmax(logits, axis=-1), v)
    assert out_nodrop.shape == (BH, S, D)
    assert float(jnp.max(jnp.abs(out_nodrop - ref))) < 5e-2  # bf16 MXU tolerance

    # full forward (with dropout, training mode)
    out = sdpa_dropout(q, k, v, seed=1234, q_tile=TQ)
    jax.block_until_ready(out)
    assert out.shape == (BH, S, D)
    assert bool(jnp.all(jnp.isfinite(out)))

    print("KERNEL_OK")
</pallas_src>

<mosaic_0001>
module attributes {stable_mosaic.version = 11 : i64} {
  func.func @_attn_kernel(%arg0: i32, %arg1: i32, %arg2: memref<1xi32, #tpu.memory_space<smem>>, %arg3: memref<1x64x64xf32, #tpu.memory_space<vmem>>, %arg4: memref<1x128x64xf32, #tpu.memory_space<vmem>>, %arg5: memref<1x128x64xf32, #tpu.memory_space<vmem>>, %arg6: memref<1x64x64xf32, #tpu.memory_space<vmem>>) attributes {dimension_semantics = [#tpu.dimension_semantics<parallel>, #tpu.dimension_semantics<parallel>], iteration_bounds = array<i64: 4, 2>, scalar_prefetch = 1 : i64, scratch_operands = 0 : i64, tpu.core_type = #tpu.core_type<tc>, window_params = [{transform_indices = @transform_0, window_bounds = array<i64: 1, 64, 64>}, {transform_indices = @transform_1, window_bounds = array<i64: 1, 128, 64>}, {transform_indices = @transform_2, window_bounds = array<i64: 1, 128, 64>}, {transform_indices = @transform_3, window_bounds = array<i64: 1, 64, 64>}]} {
    %c0 = arith.constant 0 : index
    %c0_0 = arith.constant 0 : index
    %c0_1 = arith.constant 0 : index
    %0 = vector.load %arg3[%c0, %c0_0, %c0_1] : memref<1x64x64xf32, #tpu.memory_space<vmem>>, vector<1x64x64xf32>
    %1 = vector.shape_cast %0 : vector<1x64x64xf32> to vector<64x64xf32>
    %cst = arith.constant 1.250000e-01 : f32
    %2 = vector.broadcast %cst : f32 to vector<64x64xf32>
    %3 = arith.mulf %1, %2 : vector<64x64xf32>
    %4 = arith.truncf %3 : vector<64x64xf32> to vector<64x64xbf16>
    %c0_2 = arith.constant 0 : index
    %c0_3 = arith.constant 0 : index
    %c0_4 = arith.constant 0 : index
    %5 = vector.load %arg4[%c0_2, %c0_3, %c0_4] : memref<1x128x64xf32, #tpu.memory_space<vmem>>, vector<1x128x64xf32>
    %6 = vector.shape_cast %5 : vector<1x128x64xf32> to vector<128x64xf32>
    %7 = arith.truncf %6 : vector<128x64xf32> to vector<128x64xbf16>
    %cst_5 = arith.constant dense<0.000000e+00> : vector<64x128xf32>
    %8 = tpu.matmul %4, %7, %cst_5 {dimension_numbers = #tpu.dot_dimension_numbers<[1], [1], [0], [0], [0, 0, 1, 0], [], []>} : vector<64x64xbf16>, vector<128x64xbf16>, vector<64x128xf32> -> vector<64x128xf32>
    %cst_6 = arith.constant dense<0xFF800000> : vector<64xf32>
    %9 = vector.multi_reduction <maximumf>, %8, %cst_6 [1] : vector<64x128xf32> to vector<64xf32>
    %10 = vector.shape_cast %9 : vector<64xf32> to vector<64x1xf32>
    %11 = vector.broadcast %10 : vector<64x1xf32> to vector<64x128xf32>
    %12 = arith.subf %8, %11 : vector<64x128xf32>
    %13 = math.exp %12 : vector<64x128xf32>
    %cst_7 = arith.constant dense<0.000000e+00> : vector<64xf32>
    %14 = vector.multi_reduction <add>, %13, %cst_7 [1] : vector<64x128xf32> to vector<64xf32>
    %15 = vector.shape_cast %14 : vector<64xf32> to vector<64x1xf32>
    %16 = vector.broadcast %15 : vector<64x1xf32> to vector<64x128xf32>
    %17 = arith.divf %13, %16 : vector<64x128xf32>
    %18 = arith.truncf %17 : vector<64x128xf32> to vector<64x128xbf16>
    %c0_8 = arith.constant 0 : index
    %c0_9 = arith.constant 0 : index
    %c0_10 = arith.constant 0 : index
    %19 = vector.load %arg5[%c0_8, %c0_9, %c0_10] : memref<1x128x64xf32, #tpu.memory_space<vmem>>, vector<1x128x64xf32>
    %20 = vector.shape_cast %19 : vector<1x128x64xf32> to vector<128x64xf32>
    %21 = arith.truncf %20 : vector<128x64xf32> to vector<128x64xbf16>
    %cst_11 = arith.constant dense<0.000000e+00> : vector<64x64xf32>
    %22 = tpu.matmul %18, %21, %cst_11 {dimension_numbers = #tpu.dot_dimension_numbers<[1], [0], [0], [1], [0, 0, 1, 1], [], []>} : vector<64x128xbf16>, vector<128x64xbf16>, vector<64x64xf32> -> vector<64x64xf32>
    %c0_12 = arith.constant 0 : index
    %c0_13 = arith.constant 0 : index
    %c0_14 = arith.constant 0 : index
    %23 = vector.load %arg6[%c0_12, %c0_13, %c0_14] : memref<1x64x64xf32, #tpu.memory_space<vmem>>, vector<1x64x64xf32>
    %24 = vector.shape_cast %23 : vector<1x64x64xf32> to vector<64x64xf32>
    %25 = vector.shape_cast %22 : vector<64x64xf32> to vector<1x64x64xf32>
    tpu.vector_store %arg6[%c0_12, %c0_13, %c0_14], %25 {strides = array<i32>} : memref<1x64x64xf32, #tpu.memory_space<vmem>>, vector<1x64x64xf32>,
    return
  }
  func.func @transform_0(%arg0: i32, %arg1: i32, %arg2: memref<1xi32, #tpu.memory_space<smem>>) -> (i32, i32, i32) {
    %c0_i32 = arith.constant 0 : i32
    %c0_i32_0 = arith.constant 0 : i32
    return %arg0, %arg1, %c0_i32 : i32, i32, i32
  }
  func.func @transform_1(%arg0: i32, %arg1: i32, %arg2: memref<1xi32, #tpu.memory_space<smem>>) -> (i32, i32, i32) {
    %c0_i32 = arith.constant 0 : i32
    %c0_i32_0 = arith.constant 0 : i32
    %c0_i32_1 = arith.constant 0 : i32
    return %arg0, %c0_i32, %c0_i32_0 : i32, i32, i32
  }
  func.func @transform_2(%arg0: i32, %arg1: i32, %arg2: memref<1xi32, #tpu.memory_space<smem>>) -> (i32, i32, i32) {
    %c0_i32 = arith.constant 0 : i32
    %c0_i32_0 = arith.constant 0 : i32
    %c0_i32_1 = arith.constant 0 : i32
    return %arg0, %c0_i32, %c0_i32_0 : i32, i32, i32
  }
  func.func @transform_3(%arg0: i32, %arg1: i32, %arg2: memref<1xi32, #tpu.memory_space<smem>>) -> (i32, i32, i32) {
    %c0_i32 = arith.constant 0 : i32
    %c0_i32_0 = arith.constant 0 : i32
    return %arg0, %arg1, %c0_i32 : i32, i32, i32
  }
}

</mosaic_0001>

<llo_original>
// kernel: tpu_custom_call.1
$region0: #{tpu_custom_call.1}
  #allocation0 [shape = 'u32[]', space=smem, size = 0x4, offset = 0x4, fixed_abs, tag = 'smem constant byte address 0x4 - core index']
  #allocation1 [shape = 'u32[144,128]{1,0:T(1,128)}', space=vmem, size = 0x12000, scoped, tag = 'internal scratch']
  #allocation2 [shape = 's32[1]{0}', space=sflag, size = 0x4, scoped, tag = 'scoped memory for tpu_custom_call.1']
  #allocation3 [shape = 's32[1]{0:T(128)S(6)}', space=smem, size = 0x200, scoped, tag = 'prefetched SMEM operand 0']
  %s0 = inlined_call_operand.<no memory space> [shape: s32[1], index: 0, kind: input, shape index: {}]
  %s1 = inlined_call_operand.vmem [shape: f32[4,128,64], index: 1, kind: input, shape index: {}]
  %s2 = inlined_call_operand.vmem [shape: f32[4,128,64], index: 2, kind: input, shape index: {}]
  %s3 = inlined_call_operand.vmem [shape: f32[4,128,64], index: 3, kind: input, shape index: {}]
  %s4 = inlined_call_operand.vmem [shape: f32[4,128,64], index: 4, kind: output, shape index: {}]
  %s5 = sld [smem:[#allocation0]]
  $region45: #{tpu_custom_call.1} parent=0
    _
  %s7 = ssub.s32 1, %s5
  %s8 = scalar_select 0, %s7, %s5
  %9 = sst [smem:[#allocation3]] %s0
  loop: start=0, step=1, limit=10
  $region2: #{tpu_custom_call.1} parent=0 // loop_pre_header
    _
  $region3: #{tpu_custom_call.1} parent=0 // loop_header
    %s11 = sphi 0, %s15
    %p12 = scmp.ge.s32.totalorder %s11, 10
    %s18 = sphi 0, %s30
    %s19 = sphi 0, %s26
    %s20 = sphi 0, %s18
    %s21 = sphi 0, %s19
    %s22 = sphi 0, %s20
    %s23 = sphi 0, %s21
    %s35 = sphi 0, %s37
    %s38 = sphi 0, %s35
    %s39 = sphi 0, %s38
    %s55 = sphi 0, %s39
    %s61 = sphi 0, %s63
    %s64 = sphi 0, %s61
    %s65 = sphi 0, %s64
    %s81 = sphi 0, %s65
    %s87 = sphi 0, %s89
    %s90 = sphi 0, %s87
    %s91 = sphi 0, %s90
    %s107 = sphi 0, %s91
    %s115 = sphi 0, %s117
    %s118 = sphi 0, %s115
    %s119 = sphi 0, %s118
    %s135 = sphi 0, %s119
  $region4: #{tpu_custom_call.1} parent=0 // loop_header_branch
    %14 = sbr.rel (%p12) target = $region8
  $region5: #{tpu_custom_call.1} parent=0 // loop_body
    %s16 = ssub.s32 %s11, 1
    %s17 = ssub.s32 %s11, 2
    %s24 = sadd.s32 1, %s19
    %p25 = scmp.ge.s32.totalorder %s24, 2
    %s26 = scalar_select %p25, 0, %s24
    %s27 = sadd.s32 1, %s18
    %s28 = scalar_select %p25, %s27, %s18
    %p29 = scmp.ge.s32.totalorder %s28, 4
    %s30 = scalar_select %p29, 0, %s28
    %s31 = ssub.s32 %s18, %s30
    %s32 = ssub.s32 %s19, %s26
    %s33 = sor.u32 %s31, %s32
    %p34 = scmp.eq.s32.totalorder %s33, 0
    %s36 = sadd.s32 %s35, 1
    %s37 = scalar_select %p34, %s35, %s36
    %p40 = pneg %p34
    %p41 = scmp.eq.s32.totalorder %s11, 7
    %p42 = por %p40, %p41
    %p43 = scmp.ne.s32.totalorder %s35, %s38
    %p44 = scmp.eq.s32.totalorder %s11, 0
    %p45 = por %p43, %p44
    %p46 = scmp.ne.s32.totalorder %s35, %s38
    %p47 = scmp.eq.s32.totalorder %s16, 7
    %p48 = por %p46, %p47
    %p49 = scmp.ne.s32.totalorder %s38, %s39
    %p50 = scmp.eq.s32.totalorder %s16, 0
    %p51 = por %p49, %p50
    %p52 = scmp.ne.s32.totalorder %s38, %s39
    %p53 = scmp.eq.s32.totalorder %s17, 7
    %p54 = por %p52, %p53
    %p56 = scmp.ne.s32.totalorder %s39, %s55
    %p57 = scmp.eq.s32.totalorder %s17, 0
    %p58 = por %p56, %p57
    %s59 = ssub.s32 %s18, %s30
    %p60 = scmp.eq.s32.totalorder %s59, 0
    %s62 = sadd.s32 %s61, 1
    %s63 = scalar_select %p60, %s61, %s62
    %p66 = pneg %p60
    %p67 = scmp.eq.s32.totalorder %s11, 7
    %p68 = por %p66, %p67
    %p69 = scmp.ne.s32.totalorder %s61, %s64
    %p70 = scmp.eq.s32.totalorder %s11, 0
    %p71 = por %p69, %p70
    %p72 = scmp.ne.s32.totalorder %s61, %s64
    %p73 = scmp.eq.s32.totalorder %s16, 7
    %p74 = por %p72, %p73
    %p75 = scmp.ne.s32.totalorder %s64, %s65
    %p76 = scmp.eq.s32.totalorder %s16, 0
    %p77 = por %p75, %p76
    %p78 = scmp.ne.s32.totalorder %s64, %s65
    %p79 = scmp.eq.s32.totalorder %s17, 7
    %p80 = por %p78, %p79
    %p82 = scmp.ne.s32.totalorder %s65, %s81
    %p83 = scmp.eq.s32.totalorder %s17, 0
    %p84 = por %p82, %p83
    %s85 = ssub.s32 %s18, %s30
    %p86 = scmp.eq.s32.totalorder %s85, 0
    %s88 = sadd.s32 %s87, 1
    %s89 = scalar_select %p86, %s87, %s88
    %p92 = pneg %p86
    %p93 = scmp.eq.s32.totalorder %s11, 7
    %p94 = por %p92, %p93
    %p95 = scmp.ne.s32.totalorder %s87, %s90
    %p96 = scmp.eq.s32.totalorder %s11, 0
    %p97 = por %p95, %p96
    %p98 = scmp.ne.s32.totalorder %s87, %s90
    %p99 = scmp.eq.s32.totalorder %s16, 7
    %p100 = por %p98, %p99
    %p101 = scmp.ne.s32.totalorder %s90, %s91
    %p102 = scmp.eq.s32.totalorder %s16, 0
    %p103 = por %p101, %p102
    %p104 = scmp.ne.s32.totalorder %s90, %s91
    %p105 = scmp.eq.s32.totalorder %s17, 7
    %p106 = por %p104, %p105
    %p108 = scmp.ne.s32.totalorder %s91, %s107
    %p109 = scmp.eq.s32.totalorder %s17, 0
    %p110 = por %p108, %p109
    %s111 = ssub.s32 %s18, %s30
    %s112 = ssub.s32 %s19, %s26
    %s113 = sor.u32 %s111, %s112
    %p114 = scmp.eq.s32.totalorder %s113, 0
    %s116 = sadd.s32 %s115, 1
    %s117 = scalar_select %p114, %s115, %s116
    %p120 = pneg %p114
    %p121 = scmp.eq.s32.totalorder %s11, 7
    %p122 = por %p120, %p121
    %p123 = scmp.ne.s32.totalorder %s115, %s118
    %p124 = scmp.eq.s32.totalorder %s11, 0
    %p125 = por %p123, %p124
    %p126 = scmp.ne.s32.totalorder %s115, %s118
    %p127 = scmp.eq.s32.totalorder %s16, 7
    %p128 = por %p126, %p127
    %p129 = scmp.ne.s32.totalorder %s118, %s119
    %p130 = scmp.eq.s32.totalorder %s16, 0
    %p131 = por %p129, %p130
    %p132 = scmp.ne.s32.totalorder %s118, %s119
    %p133 = scmp.eq.s32.totalorder %s17, 7
    %p134 = por %p132, %p133
    %p136 = scmp.ne.s32.totalorder %s119, %s135
    %p137 = scmp.eq.s32.totalorder %s17, 0
    %p138 = por %p136, %p137
    %p139 = scmp.le.s32.totalorder 1, %s11
    %p140 = scmp.lt.s32.totalorder %s11, 9
    %p141 = pnand %p139, %p140
    %p142 = pneg %p141
    // Predicated region
    $region9: #{tpu_custom_call.1} parent=5 // pred_check
      _
    $region10: #{tpu_custom_call.1} parent=5 // pred_check_branch
      %144 = sbr.rel (%p141) target = $region12
    $region11: #{tpu_custom_call.1} parent=5 // pred_region
      %s145 = ssub.s32 %s11, 1
    $region12: #{tpu_custom_call.1} parent=5 // pred_fallthru
      _
    %p146 = scmp.lt.s32.totalorder %s11, 8
    // Predicated region
    $region13: #{tpu_custom_call.1} parent=5 // pred_check
      %p147 = pneg %p146
    $region14: #{tpu_custom_call.1} parent=5 // pred_check_branch
      %149 = sbr.rel (%p147) target = $region16
    $region15: #{tpu_custom_call.1} parent=5 // pred_region
      // Predicated region
      $region17: #{tpu_custom_call.1} parent=15 // pred_check
        %p150 = pneg %p45
      $region18: #{tpu_custom_call.1} parent=15 // pred_check_branch
        %152 = sbr.rel (%p150) target = $region20
      $region19: #{tpu_custom_call.1} parent=15 // pred_region
        %s153 = smul.u32 8, %s19
        %p154 = scmp.lt.s32.totalorder %s18, 3
        %s155 = scalar_select %p154, %s18, 3
        %p156 = scmp.lt.s32.totalorder %s153, 15
        %s157 = scalar_select %p156, %s153, 15
        %s158 = smul.addr %s155, 16
        %s159 = sadd.s32 %s157, %s158
        %s160 = smul.addr %s159, 8
        %s161 = scalar_lea.vmem %s1, %s160
        %s162 = smul.u32 8, %s19
      $region20: #{tpu_custom_call.1} parent=15 // pred_fallthru
        _
      // Predicated region
      $region21: #{tpu_custom_call.1} parent=15 // pred_check
        %p163 = pneg %p71
      $region22: #{tpu_custom_call.1} parent=15 // pred_check_branch
        %165 = sbr.rel (%p163) target = $region24
      $region23: #{tpu_custom_call.1} parent=15 // pred_region
        %p166 = scmp.lt.s32.totalorder %s18, 3
        %s167 = scalar_select %p166, %s18, 3
        %s168 = smul.addr %s167, 16
        %s169 = smul.addr %s168, 8
        %s170 = scalar_lea.vmem %s2, %s169
      $region24: #{tpu_custom_call.1} parent=15 // pred_fallthru
        _
      // Predicated region
      $region25: #{tpu_custom_call.1} parent=15 // pred_check
        %p171 = pneg %p97
      $region26: #{tpu_custom_call.1} parent=15 // pred_check_branch
        %173 = sbr.rel (%p171) target = $region28
      $region27: #{tpu_custom_call.1} parent=15 // pred_region
        %p174 = scmp.lt.s32.totalorder %s18, 3
        %s175 = scalar_select %p174, %s18, 3
        %s176 = smul.addr %s175, 16
        %s177 = smul.addr %s176, 8
        %s178 = scalar_lea.vmem %s3, %s177
      $region28: #{tpu_custom_call.1} parent=15 // pred_fallthru
        _
    $region16: #{tpu_custom_call.1} parent=5 // pred_fallthru
      _
    %p179 = scmp.le.s32.totalorder 1, %s11
    %p180 = scmp.lt.s32.totalorder %s11, 9
    %p181 = pnand %p179, %p180
    %p182 = pneg %p181
    // Predicated region
    $region29: #{tpu_custom_call.1} parent=5 // pred_check
      _
    $region30: #{tpu_custom_call.1} parent=5 // pred_check_branch
      %184 = sbr.rel (%p181) target = $region32
    $region31: #{tpu_custom_call.1} parent=5 // pred_region
      %s185 = ssub.s32 %s11, 1
      %s186 = smul.u32 8, %s21
      %p187 = scmp.lt.s32.totalorder %s20, 3
      %s188 = scalar_select %p187, %s20, 3
      %p189 = scmp.lt.s32.totalorder %s186, 15
      %s190 = scalar_select %p189, %s186, 15
      %s191 = smul.addr %s188, 16
      %s192 = sadd.s32 %s190, %s191
      %s193 = smul.addr %s192, 8
      %s194 = scalar_lea.vmem %s1, %s193
      %p195 = pneg %p51
      %p196 = pneg %p48
      %p197 = scmp.lt.s32.totalorder %s20, 3
      %s198 = scalar_select %p197, %s20, 3
      %s199 = smul.addr %s198, 16
      %s200 = smul.addr %s199, 8
      %s201 = scalar_lea.vmem %s2, %s200
      %p202 = pneg %p77
      %p203 = pneg %p74
      %p204 = scmp.lt.s32.totalorder %s20, 3
      %s205 = scalar_select %p204, %s20, 3
      %s206 = smul.addr %s205, 16
      %s207 = smul.addr %s206, 8
      %s208 = scalar_lea.vmem %s3, %s207
      %p209 = pneg %p103
      %p210 = pneg %p100
      %p211 = pneg %p131
      %p212 = pneg %p128
      %s213 = smul.u32 8, %s21
      %p214 = scmp.lt.s32.totalorder %s20, 3
      %s215 = scalar_select %p214, %s20, 3
      %p216 = scmp.lt.s32.totalorder %s213, 15
      %s217 = scalar_select %p216, %s213, 15
      %s218 = smul.addr %s215, 16
      %s219 = sadd.s32 %s217, %s218
      %s220 = smul.addr %s219, 8
      %s221 = scalar_lea.vmem %s4, %s220
      %s222 = smul.u32 8, %s21
      %p223 = scmp.lt.s32.totalorder %s20, 3
      %s224 = scalar_select %p223, %s20, 3
      %p225 = scmp.lt.s32.totalorder %s222, 15
      %s226 = scalar_select %p225, %s222, 15
      %s227 = smul.addr %s224, 16
      %s228 = sadd.s32 %s226, %s227
      %s229 = smul.addr %s228, 8
      %s230 = scalar_lea.vmem %s1, %s229
      %s231 = smul.u32 8, %s21
      %p232 = scmp.lt.s32.totalorder %s20, 3
      %s233 = scalar_select %p232, %s20, 3
      %s234 = smul.addr %s233, 16
      %s235 = smul.addr %s234, 8
      %s236 = scalar_lea.vmem %s2, %s235
      %p237 = scmp.lt.s32.totalorder %s20, 3
      %s238 = scalar_select %p237, %s20, 3
      %s239 = smul.addr %s238, 16
      %s240 = smul.addr %s239, 8
      %s241 = scalar_lea.vmem %s3, %s240
      %s242 = smul.u32 8, %s21
      %p243 = scmp.lt.s32.totalorder %s20, 3
      %s244 = scalar_select %p243, %s20, 3
      %p245 = scmp.lt.s32.totalorder %s242, 15
      %s246 = scalar_select %p245, %s242, 15
      %s247 = smul.addr %s244, 16
      %s248 = sadd.s32 %s246, %s247
      %s249 = smul.addr %s248, 8
      %s250 = scalar_lea.vmem %s4, %s249
      %s251 = smul.u32 8, %s21
      %v253 = vld [vmem:[%s230] sm:$0xff]
      %v254 = vld [vmem:[%s230 + $0x8] sm:$0xff]
      %v255 = vld [vmem:[%s230 + $0x10] sm:$0xff]
      %v256 = vld [vmem:[%s230 + $0x18] sm:$0xff]
      %v257 = vld [vmem:[%s230 + $0x20] sm:$0xff]
      %v258 = vld [vmem:[%s230 + $0x28] sm:$0xff]
      %v259 = vld [vmem:[%s230 + $0x30] sm:$0xff]
      %v260 = vld [vmem:[%s230 + $0x38] sm:$0xff]
      %v261 = vmul.f32 %v253, 0.125
      %v262 = vmul.f32 %v254, 0.125
      %v263 = vmul.f32 %v255, 0.125
      %v264 = vmul.f32 %v256, 0.125
      %v265 = vmul.f32 %v257, 0.125
      %v266 = vmul.f32 %v258, 0.125
      %v267 = vmul.f32 %v259, 0.125
      %v268 = vmul.f32 %v260, 0.125
      %v269 = vpack.c.bf16 %v262, %v261
      %v270 = vpack.c.bf16 %v264, %v263
      %v271 = vpack.c.bf16 %v266, %v265
      %v272 = vpack.c.bf16 %v268, %v267
      %v273 = vld [vmem:[%s236] sm:$0xff]
      %v274 = vld [vmem:[%s236 + $0x8] sm:$0xff]
      %v275 = vld [vmem:[%s236 + $0x10] sm:$0xff]
      %v276 = vld [vmem:[%s236 + $0x18] sm:$0xff]
      %v277 = vld [vmem:[%s236 + $0x20] sm:$0xff]
      %v278 = vld [vmem:[%s236 + $0x28] sm:$0xff]
      %v279 = vld [vmem:[%s236 + $0x30] sm:$0xff]
      %v280 = vld [vmem:[%s236 + $0x38] sm:$0xff]
      %v281 = vld [vmem:[%s236 + $0x40] sm:$0xff]
      %v282 = vld [vmem:[%s236 + $0x48] sm:$0xff]
      %v283 = vld [vmem:[%s236 + $0x50] sm:$0xff]
      %v284 = vld [vmem:[%s236 + $0x58] sm:$0xff]
      %v285 = vld [vmem:[%s236 + $0x60] sm:$0xff]
      %v286 = vld [vmem:[%s236 + $0x68] sm:$0xff]
      %v287 = vld [vmem:[%s236 + $0x70] sm:$0xff]
      %v288 = vld [vmem:[%s236 + $0x78] sm:$0xff]
      %v289 = vpack.c.bf16 %v274, %v273
      %v290 = vpack.c.bf16 %v276, %v275
      %v291 = vpack.c.bf16 %v278, %v277
      %v292 = vpack.c.bf16 %v280, %v279
      %v293 = vpack.c.bf16 %v282, %v281
      %v294 = vpack.c.bf16 %v284, %v283
      %v295 = vpack.c.bf16 %v286, %v285
      %v296 = vpack.c.bf16 %v288, %v287
      %vm297 = vcmask 523264
      %v299 = vsel %vm297, %v269, 0
      %v302 = vsel %vm297, %v270, 0
      %v305 = vsel %vm297, %v271, 0
      %v308 = vsel %vm297, %v272, 0
      %v311 = vsel %vm297, %v289, 0
      %v314 = vsel %vm297, %v290, 0
      %v317 = vsel %vm297, %v291, 0
      %v320 = vsel %vm297, %v292, 0
      %v323 = vsel %vm297, %v293, 0
      %v326 = vsel %vm297, %v294, 0
      %v329 = vsel %vm297, %v295, 0
      %v332 = vsel %vm297, %v296, 0
      %334 = vmatprep.subr.bf16.mxu0 0
      %335 = vmatpush1.bf16.xpose.msra.mxu0 %v332
      %336 = vmatprep.subr.bf16.mxu0 0
      %337 = vmatpush1.bf16.xpose.msra.mxu0 %v329
      %338 = vmatprep.subr.bf16.mxu0 0
      %339 = vmatpush1.bf16.xpose.msra.mxu0 %v326
      %340 = vmatprep.subr.bf16.mxu0 0
      %341 = vmatpush1.bf16.xpose.msra.mxu0 %v323
      %342 = vmatprep.subr.bf16.mxu0 0
      %343 = vmatpush1.bf16.xpose.msra.mxu0 %v320
      %344 = vmatprep.subr.bf16.mxu0 0
      %345 = vmatpush1.bf16.xpose.msra.mxu0 %v317
      %346 = vmatprep.subr.bf16.mxu0 0
      %347 = vmatpush1.bf16.xpose.msra.mxu0 %v314
      %348 = vmatprep.subr.bf16.mxu0 0
      %349 = vmatpush1.bf16.xpose.msra.mxu0 %v311
      %350 = vmatprep.subr.bf16.mxu0 0
      %351 = vmatpush2.bf16.xpose.msra.mxu0 0
      %352 = vmatprep.subr.bf16.mxu0 0
      %353 = vmatpush2.bf16.xpose.msra.mxu0 0
      %354 = vmatprep.subr.bf16.mxu0 0
      %355 = vmatpush2.bf16.xpose.msra.mxu0 0
      %356 = vmatprep.subr.bf16.mxu0 0
      %357 = vmatpush2.bf16.xpose.msra.mxu0 0
      %358 = vmatprep.subr.bf16.mxu0 0
      %359 = vmatpush2.bf16.xpose.msra.mxu0 0
      %360 = vmatprep.subr.bf16.mxu0 0
      %361 = vmatpush2.bf16.xpose.msra.mxu0 0
      %362 = vmatprep.subr.bf16.mxu0 0
      %363 = vmatpush2.bf16.xpose.msra.mxu0 0
      %364 = vmatprep.subr.bf16.mxu0 0
      %365 = vmatpush2.bf16.xpose.msra.mxu0 0
      %366 = vmatprep.mubr.bf16.mxu0 0
      %367 = vmatmul.mubr.bf16.gmra.mxu0 %v299
      %v368 = vpop.f32.mrf.mxu0
      %v369 = vadd.f32 0.0, %v368
      %v370 = vpop.f32.mrf.mxu0
      %v371 = vpop.f32.mrf.mxu0
      %v372 = vadd.f32 0.0, %v371
      %v373 = vpop.f32.mrf.mxu0
      %374 = vmatprep.mubr.bf16.mxu0 0
      %375 = vmatmul.mubr.bf16.gmra.mxu0 %v302
      %v376 = vpop.f32.mrf.mxu0
      %v377 = vadd.f32 0.0, %v376
      %v378 = vpop.f32.mrf.mxu0
      %v379 = vpop.f32.mrf.mxu0
      %v380 = vadd.f32 0.0, %v379
      %v381 = vpop.f32.mrf.mxu0
      %382 = vmatprep.mubr.bf16.mxu0 0
      %383 = vmatmul.mubr.bf16.gmra.mxu0 %v305
      %v384 = vpop.f32.mrf.mxu0
      %v385 = vadd.f32 0.0, %v384
      %v386 = vpop.f32.mrf.mxu0
      %v387 = vpop.f32.mrf.mxu0
      %v388 = vadd.f32 0.0, %v387
      %v389 = vpop.f32.mrf.mxu0
      %390 = vmatprep.mubr.bf16.mxu0 0
      %391 = vmatmul.mubr.bf16.gmra.mxu0 %v308
      %v392 = vpop.f32.mrf.mxu0
      %v393 = vadd.f32 0.0, %v392
      %v394 = vpop.f32.mrf.mxu0
      %v395 = vpop.f32.mrf.mxu0
      %v396 = vadd.f32 0.0, %v395
      %v397 = vpop.f32.mrf.mxu0
      %398 = vdwg.mxu0
      %399 = vmax.xlane.f32.xlu0 %v369
      %v400 = vpop.xlane.xlu0 %399
      %401 = vmax.xlane.f32.xlu0 %v372
      %v402 = vpop.xlane.xlu0 %401
      %403 = vmax.xlane.f32.xlu0 %v377
      %v404 = vpop.xlane.xlu0 %403
      %405 = vmax.xlane.f32.xlu0 %v380
      %v406 = vpop.xlane.xlu0 %405
      %407 = vmax.xlane.f32.xlu0 %v385
      %v408 = vpop.xlane.xlu0 %407
      %409 = vmax.xlane.f32.xlu0 %v388
      %v410 = vpop.xlane.xlu0 %409
      %411 = vmax.xlane.f32.xlu0 %v393
      %v412 = vpop.xlane.xlu0 %411
      %413 = vmax.xlane.f32.xlu0 %v396
      %v414 = vpop.xlane.xlu0 %413
      %v415 = vsub.f32 %v369, %v400
      %v416 = vsub.f32 %v372, %v402
      %v417 = vsub.f32 %v377, %v404
      %v418 = vsub.f32 %v380, %v406
      %v419 = vsub.f32 %v385, %v408
      %v420 = vsub.f32 %v388, %v410
      %v421 = vsub.f32 %v393, %v412
      %v422 = vsub.f32 %v396, %v414
      %v423 = vmul.f32 %v415, 1.442695
      %v424 = vpow.pop %v423
      %v425 = vmul.f32 %v416, 1.442695
      %v426 = vpow.pop %v425
      %v427 = vmul.f32 %v417, 1.442695
      %v428 = vpow.pop %v427
      %v429 = vmul.f32 %v418, 1.442695
      %v430 = vpow.pop %v429
      %v431 = vmul.f32 %v419, 1.442695
      %v432 = vpow.pop %v431
      %v433 = vmul.f32 %v420, 1.442695
      %v434 = vpow.pop %v433
      %v435 = vmul.f32 %v421, 1.442695
      %v436 = vpow.pop %v435
      %v437 = vmul.f32 %v422, 1.442695
      %v438 = vpow.pop %v437
      %439 = vadd.xlane.f32.xlu0 %v424
      %v440 = vpop.xlane.xlu0 %439
      %441 = vadd.xlane.f32.xlu0 %v426
      %v442 = vpop.xlane.xlu0 %441
      %443 = vadd.xlane.f32.xlu0 %v428
      %v444 = vpop.xlane.xlu0 %443
      %445 = vadd.xlane.f32.xlu0 %v430
      %v446 = vpop.xlane.xlu0 %445
      %447 = vadd.xlane.f32.xlu0 %v432
      %v448 = vpop.xlane.xlu0 %447
      %449 = vadd.xlane.f32.xlu0 %v434
      %v450 = vpop.xlane.xlu0 %449
      %451 = vadd.xlane.f32.xlu0 %v436
      %v452 = vpop.xlane.xlu0 %451
      %453 = vadd.xlane.f32.xlu0 %v438
      %v454 = vpop.xlane.xlu0 %453
      %v455 = vrcp.pop %v440
      %v456 = vmul.f32 %v424, %v455
      %v457 = vrcp.pop %v442
      %v458 = vmul.f32 %v426, %v457
      %v459 = vrcp.pop %v444
      %v460 = vmul.f32 %v428, %v459
      %v461 = vrcp.pop %v446
      %v462 = vmul.f32 %v430, %v461
      %v463 = vrcp.pop %v448
      %v464 = vmul.f32 %v432, %v463
      %v465 = vrcp.pop %v450
      %v466 = vmul.f32 %v434, %v465
      %v467 = vrcp.pop %v452
      %v468 = vmul.f32 %v436, %v467
      %v469 = vrcp.pop %v454
      %v470 = vmul.f32 %v438, %v469
      %v471 = vpack.c.bf16 %v458, %v456
      %v472 = vpack.c.bf16 %v462, %v460
      %v473 = vpack.c.bf16 %v466, %v464
      %v474 = vpack.c.bf16 %v470, %v468
      %v475 = vld [vmem:[%s241] sm:$0xff]
      %v476 = vld [vmem:[%s241 + $0x8] sm:$0xff]
      %v477 = vld [vmem:[%s241 + $0x10] sm:$0xff]
      %v478 = vld [vmem:[%s241 + $0x18] sm:$0xff]
      %v479 = vld [vmem:[%s241 + $0x20] sm:$0xff]
      %v480 = vld [vmem:[%s241 + $0x28] sm:$0xff]
      %v481 = vld [vmem:[%s241 + $0x30] sm:$0xff]
      %v482 = vld [vmem:[%s241 + $0x38] sm:$0xff]
      %v483 = vld [vmem:[%s241 + $0x40] sm:$0xff]
      %v484 = vld [vmem:[%s241 + $0x48] sm:$0xff]
      %v485 = vld [vmem:[%s241 + $0x50] sm:$0xff]
      %v486 = vld [vmem:[%s241 + $0x58] sm:$0xff]
      %v487 = vld [vmem:[%s241 + $0x60] sm:$0xff]
      %v488 = vld [vmem:[%s241 + $0x68] sm:$0xff]
      %v489 = vld [vmem:[%s241 + $0x70] sm:$0xff]
      %v490 = vld [vmem:[%s241 + $0x78] sm:$0xff]
      %v491 = vpack.c.bf16 %v476, %v475
      %v492 = vpack.c.bf16 %v478, %v477
      %v493 = vpack.c.bf16 %v480, %v479
      %v494 = vpack.c.bf16 %v482, %v481
      %v495 = vpack.c.bf16 %v484, %v483
      %v496 = vpack.c.bf16 %v486, %v485
      %v497 = vpack.c.bf16 %v488, %v487
      %v498 = vpack.c.bf16 %v490, %v489
      %499 = vmatprep.subr.bf16.mxu0 0
      %500 = vmatpush1.bf16.msra.mxu0 %v498
      %501 = vmatprep.subr.bf16.mxu0 0
      %502 = vmatpush1.bf16.msra.mxu0 %v497
      %503 = vmatprep.subr.bf16.mxu0 0
      %504 = vmatpush1.bf16.msra.mxu0 %v496
      %505 = vmatprep.subr.bf16.mxu0 0
      %506 = vmatpush1.bf16.msra.mxu0 %v495
      %507 = vmatprep.subr.bf16.mxu0 0
      %508 = vmatpush1.bf16.msra.mxu0 %v494
      %509 = vmatprep.subr.bf16.mxu0 0
      %510 = vmatpush1.bf16.msra.mxu0 %v493
      %511 = vmatprep.subr.bf16.mxu0 0
      %512 = vmatpush1.bf16.msra.mxu0 %v492
      %513 = vmatprep.subr.bf16.mxu0 0
      %514 = vmatpush1.bf16.msra.mxu0 %v491
      %515 = vmatprep.subr.bf16.mxu0 0
      %516 = vmatpush2.bf16.msra.mxu0 0
      %517 = vmatprep.subr.bf16.mxu0 0
      %518 = vmatpush2.bf16.msra.mxu0 0
      %519 = vmatprep.subr.bf16.mxu0 0
      %520 = vmatpush2.bf16.msra.mxu0 0
      %521 = vmatprep.subr.bf16.mxu0 0
      %522 = vmatpush2.bf16.msra.mxu0 0
      %523 = vmatprep.subr.bf16.mxu0 0
      %524 = vmatpush2.bf16.msra.mxu0 0
      %525 = vmatprep.subr.bf16.mxu0 0
      %526 = vmatpush2.bf16.msra.mxu0 0
      %527 = vmatprep.subr.bf16.mxu0 0
      %528 = vmatpush2.bf16.msra.mxu0 0
      %529 = vmatprep.subr.bf16.mxu0 0
      %530 = vmatpush2.bf16.msra.mxu0 0
      %531 = vmatprep.mubr.bf16.mxu0 0
      %532 = vmatmul.mubr.bf16.gmra.mxu0 %v471
      %v533 = vpop.f32.mrf.mxu0
      %v534 = vadd.f32 0.0, %v533
      %v535 = vpop.f32.mrf.mxu0
      %v536 = vpop.f32.mrf.mxu0
      %v537 = vadd.f32 0.0, %v536
      %v538 = vpop.f32.mrf.mxu0
      %539 = vmatprep.mubr.bf16.mxu0 0
      %540 = vmatmul.mubr.bf16.gmra.mxu0 %v472
      %v541 = vpop.f32.mrf.mxu0
      %v542 = vadd.f32 0.0, %v541
      %v543 = vpop.f32.mrf.mxu0
      %v544 = vpop.f32.mrf.mxu0
      %v545 = vadd.f32 0.0, %v544
      %v546 = vpop.f32.mrf.mxu0
      %547 = vmatprep.mubr.bf16.mxu0 0
      %548 = vmatmul.mubr.bf16.gmra.mxu0 %v473
      %v549 = vpop.f32.mrf.mxu0
      %v550 = vadd.f32 0.0, %v549
      %v551 = vpop.f32.mrf.mxu0
      %v552 = vpop.f32.mrf.mxu0
      %v553 = vadd.f32 0.0, %v552
      %v554 = vpop.f32.mrf.mxu0
      %555 = vmatprep.mubr.bf16.mxu0 0
      %556 = vmatmul.mubr.bf16.gmra.mxu0 %v474
      %v557 = vpop.f32.mrf.mxu0
      %v558 = vadd.f32 0.0, %v557
      %v559 = vpop.f32.mrf.mxu0
      %v560 = vpop.f32.mrf.mxu0
      %v561 = vadd.f32 0.0, %v560
      %v562 = vpop.f32.mrf.mxu0
      %563 = vdwg.mxu0
      %564 = vst.msk [vmem:[%s250] sm:$0xff] %vm297, %v534
      %565 = vst.msk [vmem:[%s250 + $0x8] sm:$0xff] %vm297, %v537
      %566 = vst.msk [vmem:[%s250 + $0x10] sm:$0xff] %vm297, %v542
      %567 = vst.msk [vmem:[%s250 + $0x18] sm:$0xff] %vm297, %v545
      %568 = vst.msk [vmem:[%s250 + $0x20] sm:$0xff] %vm297, %v550
      %569 = vst.msk [vmem:[%s250 + $0x28] sm:$0xff] %vm297, %v553
      %570 = vst.msk [vmem:[%s250 + $0x30] sm:$0xff] %vm297, %v558
      %571 = vst.msk [vmem:[%s250 + $0x38] sm:$0xff] %vm297, %v561
      %s572 = smul.u32 8, %s21
      %p573 = scmp.lt.s32.totalorder %s20, 3
      %s574 = scalar_select %p573, %s20, 3
      %p575 = scmp.lt.s32.totalorder %s572, 15
      %s576 = scalar_select %p575, %s572, 15
      %s577 = smul.addr %s574, 16
      %s578 = sadd.s32 %s576, %s577
      %s579 = smul.addr %s578, 8
      %s580 = scalar_lea.vmem %s4, %s579
      // Predicated region
      $region33: #{tpu_custom_call.1} parent=31 // pred_check
        %p581 = pneg %p128
      $region34: #{tpu_custom_call.1} parent=31 // pred_check_branch
        %583 = sbr.rel (%p581) target = $region36
      $region35: #{tpu_custom_call.1} parent=31 // pred_region
        %s584 = smul.u32 8, %s21
      $region36: #{tpu_custom_call.1} parent=31 // pred_fallthru
        _
    $region32: #{tpu_custom_call.1} parent=5 // pred_fallthru
      _
    %p585 = scmp.le.s32.totalorder 2, %s11
    // Predicated region
    $region37: #{tpu_custom_call.1} parent=5 // pred_check
      %p586 = pneg %p585
    $region38: #{tpu_custom_call.1} parent=5 // pred_check_branch
      %588 = sbr.rel (%p586) target = $region40
    $region39: #{tpu_custom_call.1} parent=5 // pred_region
      %s589 = ssub.s32 %s11, 2
      // Predicated region
      $region41: #{tpu_custom_call.1} parent=39 // pred_check
        %p590 = pneg %p134
      $region42: #{tpu_custom_call.1} parent=39 // pred_check_branch
        %592 = sbr.rel (%p590) target = $region44
      $region43: #{tpu_custom_call.1} parent=39 // pred_region
        %s593 = smul.u32 8, %s23
        %p594 = scmp.lt.s32.totalorder %s22, 3
        %s595 = scalar_select %p594, %s22, 3
        %p596 = scmp.lt.s32.totalorder %s593, 15
        %s597 = scalar_select %p596, %s593, 15
        %s598 = smul.addr %s595, 16
        %s599 = sadd.s32 %s597, %s598
        %s600 = smul.addr %s599, 8
        %s601 = scalar_lea.vmem %s4, %s600
      $region44: #{tpu_custom_call.1} parent=39 // pred_fallthru
        _
    $region40: #{tpu_custom_call.1} parent=5 // pred_fallthru
      _
  $region6: #{tpu_custom_call.1} parent=0 // loop_footer
    %s15 = sadd.s32 1, %s11
  $region7: #{tpu_custom_call.1} parent=0 // loop_footer_branch
    %10 = sbr.rel target = $region3
  $region8: #{tpu_custom_call.1} parent=0 // loop_exit
    _

</llo_original>
